<compile_context>
chip_gen: v7x
topology: tpu7x:2x2x1
jax: 0.10.0
libtpu: 0.0.40
codegen_flags: <defaults>
</compile_context>

<pallas_src>
import jax
import jax.numpy as jnp
from jax.experimental import pallas as pl
from jax.experimental.pallas import tpu as pltpu


_SUBLANE = 8
_LANE = 128
_UNROLL_MAX_C = 64                              # fully unrolled tournament up to this C
_INPUT_BUFFER_BUDGET_BYTES = 8 * 1024 * 1024    # per pipeline buffer (x2 double-buffered)
_VMEM_LIMIT_BYTES = 48 * 1024 * 1024            # scoped VMEM request (fits v7x's 64 MiB)
_MEGACORE_MIN_BYTES = 2 * 1024 * 1024           # below this, don't bother splitting


def _round_up(x: int, m: int) -> int:
    return ((x + m - 1) // m) * m


def _cdiv(a: int, b: int) -> int:
    return (a + b - 1) // b


def _argmax_dim1_kernel(x_ref, o_ref):
    """x_ref: (BN, C, T_HW) f32 block; o_ref: (BN, T_HW) i32 block."""
    c = x_ref.shape[1]

    # Running tournament over channels.  torch.argmax semantics: NaN compares
    # greater than everything (incl. +inf); strict '>' keeps the first
    # occurrence on ties.
    best_val = x_ref[:, 0, :]
    best_idx = jnp.zeros(best_val.shape, dtype=jnp.int32)

    if c <= _UNROLL_MAX_C:
        for ci in range(1, c):
            v = x_ref[:, ci, :]
            take = (v > best_val) | (jnp.isnan(v) & (~jnp.isnan(best_val)))
            best_val = jnp.where(take, v, best_val)
            best_idx = jnp.where(take, jnp.int32(ci), best_idx)
    else:
        def body(ci, carry):
            bv, bi = carry
            v = x_ref[:, ci, :]
            take = (v > bv) | (jnp.isnan(v) & (~jnp.isnan(bv)))
            return (jnp.where(take, v, bv),
                    jnp.where(take, ci.astype(jnp.int32), bi))
        best_val, best_idx = jax.lax.fori_loop(1, c, body, (best_val, best_idx))

    o_ref[...] = best_idx


def _choose_tiling(n: int, c: int, hw: int):
    """Pick (BN, T_HW) jointly against the per-buffer VMEM budget."""
    c_pad = _round_up(c, _SUBLANE)          # f32 sublane padding of the C axis
    bytes_per_col = c_pad * 4               # per batch-row, per hw element (padded)

    # HW tile: lane axis, multiple of 128 (or full extent if hw <= 128).
    if hw <= _LANE:
        t_hw = hw
    else:
        min_bn = n if n <= _SUBLANE else _SUBLANE
        max_t = _INPUT_BUFFER_BUDGET_BYTES // (min_bn * bytes_per_col)
        max_t = max(_LANE, (max_t // _LANE) * _LANE)
        t_hw = min(max_t, _round_up(hw, _LANE))

    # Batch tile: multiple of 8 (or full n if n <= 8), within remaining budget.
    if n <= _SUBLANE:
        bn = n
    else:
        max_bn = _INPUT_BUFFER_BUDGET_BYTES // (t_hw * bytes_per_col)
        max_bn = max(_SUBLANE, (max_bn // _SUBLANE) * _SUBLANE)
        bn = min(max_bn, _round_up(n, _SUBLANE))

    # Megacore (v7x: 2 TCs): keep >= 2 grid steps for non-trivial problems.
    total_bytes = n * bytes_per_col * hw
    if _cdiv(n, bn) * _cdiv(hw, t_hw) < 2 and total_bytes >= _MEGACORE_MIN_BYTES:
        if hw > 2 * _LANE:
            t_hw = max(_LANE, _round_up(_cdiv(hw, 2), _LANE))
        elif n > 2 * _SUBLANE:
            bn = max(_SUBLANE, _round_up(_cdiv(n, 2), _SUBLANE))

    return bn, t_hw


def argmax_dim1(x: jax.Array) -> jax.Array:
    """ArgMax over dim=1 of an NCHW float tensor, computed in a Pallas kernel."""
    n, c, h, w = x.shape
    hw = h * w
    x_flat = x.reshape(n, c, hw)

    bn, t_hw = _choose_tiling(n, c, hw)
    grid = (_cdiv(n, bn), _cdiv(hw, t_hw))

    out = pl.pallas_call(
        _argmax_dim1_kernel,
        out_shape=jax.ShapeDtypeStruct((n, hw), jnp.int32),
        grid_spec=pltpu.PrefetchScalarGridSpec(
            num_scalar_prefetch=0,
            grid=grid,
            in_specs=[pl.BlockSpec((bn, c, t_hw), lambda i, j: (i, 0, j))],
            out_specs=pl.BlockSpec((bn, t_hw), lambda i, j: (i, j)),
        ),
        compiler_params=pltpu.CompilerParams(
            dimension_semantics=("parallel", "parallel"),
            vmem_limit_bytes=_VMEM_LIMIT_BYTES,
        ),
        cost_estimate=pl.CostEstimate(
            flops=0,
            transcendentals=0,
            bytes_accessed=n * c * hw * 4 + n * hw * 4,
        ),
    )(x_flat)

    return out.reshape(n, h, w)


if __name__ == "__main__":
    key = jax.random.PRNGKey(0)
    # Small shape consistent with the module: batch=2, channels=4, spatial=16.
    x = jax.random.normal(key, (2, 4, 16, 16), dtype=jnp.float32)

    y = argmax_dim1(x)
    jax.block_until_ready(y)

    # Sanity check against plain JAX argmax (same first-occurrence semantics).
    y_ref = jnp.argmax(x, axis=1).astype(jnp.int32)
    assert y.shape == (2, 16, 16)
    assert y.dtype == jnp.int32
    assert bool(jnp.all(y == y_ref))

    print("KERNEL_OK")
</pallas_src>

<mosaic_0001>
module attributes {stable_mosaic.version = 11 : i64} {
  func.func @_argmax_dim1_kernel(%arg0: i32, %arg1: i32, %arg2: memref<2x4x256xf32, #tpu.memory_space<vmem>>, %arg3: memref<2x256xi32, #tpu.memory_space<vmem>>) attributes {dimension_semantics = [#tpu.dimension_semantics<parallel>, #tpu.dimension_semantics<parallel>], iteration_bounds = array<i64: 1, 1>, scalar_prefetch = 0 : i64, scratch_operands = 0 : i64, tpu.core_type = #tpu.core_type<tc>, window_params = [{transform_indices = @transform_0, window_bounds = array<i64: 2, 4, 256>}, {transform_indices = @transform_1, window_bounds = array<i64: 2, 256>}]} {
    %c0 = arith.constant 0 : index
    %c0_0 = arith.constant 0 : index
    %c0_1 = arith.constant 0 : index
    %0 = vector.load %arg2[%c0, %c0_0, %c0_1] : memref<2x4x256xf32, #tpu.memory_space<vmem>>, vector<2x1x256xf32>
    %1 = vector.shape_cast %0 : vector<2x1x256xf32> to vector<2x256xf32>
    %c0_i32 = arith.constant 0 : i32
    %2 = vector.broadcast %c0_i32 : i32 to vector<2x256xi32>
    %c0_2 = arith.constant 0 : index
    %c1 = arith.constant 1 : index
    %c0_3 = arith.constant 0 : index
    %3 = vector.load %arg2[%c0_2, %c1, %c0_3] : memref<2x4x256xf32, #tpu.memory_space<vmem>>, vector<2x1x256xf32>
    %4 = vector.shape_cast %3 : vector<2x1x256xf32> to vector<2x256xf32>
    %5 = arith.cmpf ogt, %4, %1 : vector<2x256xf32>
    %6 = arith.cmpf one, %4, %4 : vector<2x256xf32>
    %7 = arith.cmpf one, %1, %1 : vector<2x256xf32>
    %cst = arith.constant dense<true> : vector<2x256xi1>
    %8 = arith.xori %7, %cst : vector<2x256xi1>
    %9 = arith.andi %6, %8 : vector<2x256xi1>
    %10 = arith.ori %5, %9 : vector<2x256xi1>
    %11 = arith.select %10, %4, %1 : vector<2x256xi1>, vector<2x256xf32>
    %c1_i32 = arith.constant 1 : i32
    %12 = vector.broadcast %c1_i32 : i32 to vector<2x256xi32>
    %13 = arith.select %10, %12, %2 : vector<2x256xi1>, vector<2x256xi32>
    %c0_4 = arith.constant 0 : index
    %c2 = arith.constant 2 : index
    %c0_5 = arith.constant 0 : index
    %14 = vector.load %arg2[%c0_4, %c2, %c0_5] : memref<2x4x256xf32, #tpu.memory_space<vmem>>, vector<2x1x256xf32>
    %15 = vector.shape_cast %14 : vector<2x1x256xf32> to vector<2x256xf32>
    %16 = arith.cmpf ogt, %15, %11 : vector<2x256xf32>
    %17 = arith.cmpf one, %15, %15 : vector<2x256xf32>
    %18 = arith.cmpf one, %11, %11 : vector<2x256xf32>
    %cst_6 = arith.constant dense<true> : vector<2x256xi1>
    %19 = arith.xori %18, %cst_6 : vector<2x256xi1>
    %20 = arith.andi %17, %19 : vector<2x256xi1>
    %21 = arith.ori %16, %20 : vector<2x256xi1>
    %22 = arith.select %21, %15, %11 : vector<2x256xi1>, vector<2x256xf32>
    %c2_i32 = arith.constant 2 : i32
    %23 = vector.broadcast %c2_i32 : i32 to vector<2x256xi32>
    %24 = arith.select %21, %23, %13 : vector<2x256xi1>, vector<2x256xi32>
    %c0_7 = arith.constant 0 : index
    %c3 = arith.constant 3 : index
    %c0_8 = arith.constant 0 : index
    %25 = vector.load %arg2[%c0_7, %c3, %c0_8] : memref<2x4x256xf32, #tpu.memory_space<vmem>>, vector<2x1x256xf32>
    %26 = vector.shape_cast %25 : vector<2x1x256xf32> to vector<2x256xf32>
    %27 = arith.cmpf ogt, %26, %22 : vector<2x256xf32>
    %28 = arith.cmpf one, %26, %26 : vector<2x256xf32>
    %29 = arith.cmpf one, %22, %22 : vector<2x256xf32>
    %cst_9 = arith.constant dense<true> : vector<2x256xi1>
    %30 = arith.xori %29, %cst_9 : vector<2x256xi1>
    %31 = arith.andi %28, %30 : vector<2x256xi1>
    %32 = arith.ori %27, %31 : vector<2x256xi1>
    %c3_i32 = arith.constant 3 : i32
    %33 = vector.broadcast %c3_i32 : i32 to vector<2x256xi32>
    %34 = arith.select %32, %33, %24 : vector<2x256xi1>, vector<2x256xi32>
    %c0_10 = arith.constant 0 : index
    %c0_11 = arith.constant 0 : index
    %35 = vector.load %arg3[%c0_10, %c0_11] : memref<2x256xi32, #tpu.memory_space<vmem>>, vector<2x256xi32>
    tpu.vector_store %arg3[%c0_10, %c0_11], %34 {strides = array<i32>} : memref<2x256xi32, #tpu.memory_space<vmem>>, vector<2x256xi32>,
    return
  }
  func.func @transform_0(%arg0: i32, %arg1: i32) -> (i32, i32, i32) {
    %c0_i32 = arith.constant 0 : i32
    %c0_i32_0 = arith.constant 0 : i32
    return %arg0, %c0_i32, %arg1 : i32, i32, i32
  }
  func.func @transform_1(%arg0: i32, %arg1: i32) -> (i32, i32) {
    %c0_i32 = arith.constant 0 : i32
    return %arg0, %arg1 : i32, i32
  }
}

</mosaic_0001>

<llo_original>
// kernel: tpu_custom_call.1
$region0: #{tpu_custom_call.1}
  #allocation0 [shape = 'u32[]', space=smem, size = 0x4, offset = 0x4, fixed_abs, tag = 'smem constant byte address 0x4 - core index']
  #allocation1 [shape = 'u32[144,128]{1,0:T(1,128)}', space=vmem, size = 0x12000, scoped, tag = 'internal scratch']
  %s0 = inlined_call_operand.hbm [shape: f32[2,4,256], index: 0, kind: input, shape index: {}]
  %s1 = inlined_call_operand.hbm [shape: s32[2,256], index: 1, kind: output, shape index: {}]
  %s2 = sld [smem:[#allocation0]]
  $region18: #{tpu_custom_call.1} parent=0
    _
  %s4 = ssub.s32 1, %s2
  %s5 = scalar_select 0, %s4, %s2
  $region1: #{tpu_custom_call.1} parent=0
    #allocation2 [shape = 'u8[8192]{0}', space=vmem, size = 0x2000, scoped, tag = 'input window, operand 0, single buffered']
    #allocation3 [shape = 's32[1]{0}', space=sflag, size = 0x4, scoped, tag = 'scoped memory for tpu_custom_call.1']
    #allocation4 [shape = 's32[1]{0}', space=sflag, size = 0x4, scoped, tag = 'scoped memory for tpu_custom_call.1']
    #allocation5 [shape = 'u8[2048]{0}', space=vmem, size = 0x800, scoped, tag = 'output window, operand 0, single buffered']
    %6 = vsyncpa [#allocation3], 0
    %7 = vsyncpa [#allocation4], 0
    // Predicated region
    $region2: #{tpu_custom_call.1} parent=1 // pred_check
      _
    $region3: #{tpu_custom_call.1} parent=1 // pred_check_branch
      %9 = sbr.rel (0) target = $region5
    $region4: #{tpu_custom_call.1} parent=1 // pred_region
      %s11 = ssub.s32 256, 256
      %12 = vsyncadd [#allocation3], %s11
      %s13 = sshll.u32 [#allocation2], 4
      %s14 = int_to_ptr.vmem [resolvable:$true] %s13
      %19 = dma.hbm_to_vmem [thread:$0]  %s0, 256, %s14, [#allocation3], 128, 128, 8
    $region5: #{tpu_custom_call.1} parent=1 // pred_fallthru
      _
    // Predicated region
    $region6: #{tpu_custom_call.1} parent=1 // pred_check
      _
    $region7: #{tpu_custom_call.1} parent=1 // pred_check_branch
      %21 = sbr.rel (0) target = $region9
    $region8: #{tpu_custom_call.1} parent=1 // pred_region
      %22 = dma.done [#allocation3], 256
    $region9: #{tpu_custom_call.1} parent=1 // pred_fallthru
      _
    %v23 = vld [vmem:[#allocation2] ss:$4 sm:$0x3]
    %s24 = scalar_lea.vmem [#allocation2], 8
    %v25 = vld [vmem:[%s24] ss:$4 sm:$0x3]
    %s26 = scalar_lea.vmem [#allocation2], 1
    %v27 = vld [vmem:[%s26] ss:$4 sm:$0x3]
    %s28 = scalar_lea.vmem [#allocation2], 9
    %v29 = vld [vmem:[%s28] ss:$4 sm:$0x3]
    %vm30 = vcmp.gt.f32.partialorder %v27, %v23
    %vm31 = vcmp.gt.f32.partialorder %v29, %v25
    %vm32 = vcmp.ne.f32.partialorder %v27, %v27
    %vm33 = vcmp.ne.f32.partialorder %v29, %v29
    %vm34 = vcmp.ne.f32.partialorder %v23, %v23
    %vm35 = vcmp.ne.f32.partialorder %v25, %v25
    %vm36 = vmxor %vm34, 1
    %vm37 = vmxor %vm35, 1
    %vm38 = vmand %vm32, %vm36
    %vm39 = vmand %vm33, %vm37
    %vm40 = vmor %vm30, %vm38
    %vm41 = vmor %vm31, %vm39
    %v42 = vsel %vm40, %v27, %v23
    %v43 = vsel %vm41, %v29, %v25
    %v44 = vsel %vm40, 1, 0
    %v45 = vsel %vm41, 1, 0
    %s46 = scalar_lea.vmem [#allocation2], 2
    %v47 = vld [vmem:[%s46] ss:$4 sm:$0x3]
    %s48 = scalar_lea.vmem [#allocation2], 10
    %v49 = vld [vmem:[%s48] ss:$4 sm:$0x3]
    %vm50 = vcmp.gt.f32.partialorder %v47, %v42
    %vm51 = vcmp.gt.f32.partialorder %v49, %v43
    %vm52 = vcmp.ne.f32.partialorder %v47, %v47
    %vm53 = vcmp.ne.f32.partialorder %v49, %v49
    %vm54 = vcmp.ne.f32.partialorder %v42, %v42
    %vm55 = vcmp.ne.f32.partialorder %v43, %v43
    %vm56 = vmxor %vm54, 1
    %vm57 = vmxor %vm55, 1
    %vm58 = vmand %vm52, %vm56
    %vm59 = vmand %vm53, %vm57
    %vm60 = vmor %vm50, %vm58
    %vm61 = vmor %vm51, %vm59
    %v62 = vsel %vm60, %v47, %v42
    %v63 = vsel %vm61, %v49, %v43
    %v64 = vsel %vm60, 2, %v44
    %v65 = vsel %vm61, 2, %v45
    %s66 = scalar_lea.vmem [#allocation2], 3
    %v67 = vld [vmem:[%s66] ss:$4 sm:$0x3]
    %s68 = scalar_lea.vmem [#allocation2], 11
    %v69 = vld [vmem:[%s68] ss:$4 sm:$0x3]
    %vm70 = vcmp.gt.f32.partialorder %v67, %v62
    %vm71 = vcmp.gt.f32.partialorder %v69, %v63
    %vm72 = vcmp.ne.f32.partialorder %v67, %v67
    %vm73 = vcmp.ne.f32.partialorder %v69, %v69
    %vm74 = vcmp.ne.f32.partialorder %v62, %v62
    %vm75 = vcmp.ne.f32.partialorder %v63, %v63
    %vm76 = vmxor %vm74, 1
    %vm77 = vmxor %vm75, 1
    %vm78 = vmand %vm72, %vm76
    %vm79 = vmand %vm73, %vm77
    %vm80 = vmor %vm70, %vm78
    %vm81 = vmor %vm71, %vm79
    %v82 = vsel %vm80, 3, %v64
    %v83 = vsel %vm81, 3, %v65
    %v84 = vcombine.low %v82, %v83
    %v86 = vunpack.c.l.s4 1935823168
    %v87 = vunpack.c.0.s8 %v86
    %v88 = vlaneseq
    %v89 = vshrl.u32 %v88, 7
    %v90 = vsub.s32 %v87, %v89
    %v91 = vrot.slane %v84, %v90
    %92 = vst [vmem:[#allocation5] sm:$0xf] %v91
    // Predicated region
    $region10: #{tpu_custom_call.1} parent=1 // pred_check
      _
    $region11: #{tpu_custom_call.1} parent=1 // pred_check_branch
      %94 = sbr.rel (0) target = $region13
    $region12: #{tpu_custom_call.1} parent=1 // pred_region
      %s96 = ssub.s32 64, 64
      %97 = vsyncadd [#allocation4], %s96
      %s99 = sshll.u32 [#allocation5], 4
      %s100 = int_to_ptr.vmem [resolvable:$true] %s99
      %102 = dma.vmem_to_hbm [thread:$0]  %s100, 64, %s1, [#allocation4]
    $region13: #{tpu_custom_call.1} parent=1 // pred_fallthru
      _
    // Predicated region
    $region14: #{tpu_custom_call.1} parent=1 // pred_check
      _
    $region15: #{tpu_custom_call.1} parent=1 // pred_check_branch
      %104 = sbr.rel (0) target = $region17
    $region16: #{tpu_custom_call.1} parent=1 // pred_region
      %105 = dma.done [#allocation4], 64
    $region17: #{tpu_custom_call.1} parent=1 // pred_fallthru
      _
    %106 = vsyncpa [#allocation3], 1
    %107 = vsyncpa [#allocation4], 1

</llo_original>
